<compile_context>
chip_gen: v7x
topology: tpu7x:2x2x1
jax: 0.10.0
libtpu: 0.0.40
codegen_flags: <defaults>
</compile_context>

<pallas_src>
from functools import partial

import jax
import jax.numpy as jnp
from jax import lax
from jax.experimental import pallas as pl
from jax.experimental.pallas import tpu as pltpu

_SQRT_HALF = 0.7071067811865476  # 1/sqrt(2)

# TODO(synk): Dropout with p > 0 (training mode) is not implemented; the
# module default p=0.0 makes both Dropout layers identities.


def _erf_f32(z):
    """erf via Abramowitz & Stegun 7.1.26 (max abs err ~1.5e-7), f32 math."""
    a1, a2, a3, a4, a5 = (0.254829592, -0.284496736, 1.421413741,
                          -1.453152027, 1.061405429)
    p = 0.3275911
    az = jnp.abs(z)
    t = 1.0 / (1.0 + p * az)
    poly = ((((a5 * t + a4) * t + a3) * t + a2) * t + a1) * t
    y = 1.0 - poly * jnp.exp(-az * az)          # exp -> EUP slot (cheap)
    return jnp.where(z < 0.0, -y, y)


def _gelu_exact(h):
    """Exact (erf-based) GELU, matching torch.nn.GELU's default, in f32."""
    return 0.5 * h * (1.0 + _erf_f32(h * _SQRT_HALF))


def _ffn_kernel(x_ref, w1t_ref, b1_ref, w2t_ref, b2_ref, o_ref, acc_ref, *, ck):
    # x_ref:   (1, dim, tn)   -- tokens on the lane axis, native dtype
    # w1t_ref: (inner, dim)   -- W1^T, resident in VMEM
    # b1_ref:  (inner, 1)
    # w2t_ref: (dim, inner)   -- W2^T, resident in VMEM
    # b2_ref:  (dim, 1)
    # o_ref:   (1, dim, tn)
    # acc_ref: (dim, tn) f32 VMEM scratch accumulator
    x = x_ref[0]                                   # (dim, tn), native dtype
    inner = w1t_ref.shape[0]

    # Static (trace-time unrolled) chunk loop over the inner dim: bounds the
    # f32 (ck, tn) intermediate so it never blows past the vreg file, and the
    # second matmul contracts over a full `ck`-wide K.
    for k in range(inner // ck):
        lo = k * ck
        # Linear 1 (MXU, f32 accumulation), native-dtype operands.
        h = jnp.dot(w1t_ref[lo:lo + ck, :], x,
                    preferred_element_type=jnp.float32)
        h = h + b1_ref[lo:lo + ck, :].astype(jnp.float32)
        h = _gelu_exact(h)
        # Dropout(p=0.0) is identity -> nothing to do.
        # Linear 2 chunk, accumulated into the f32 VMEM scratch.
        contrib = jnp.dot(w2t_ref[:, lo:lo + ck], h.astype(w2t_ref.dtype),
                          preferred_element_type=jnp.float32)
        if k == 0:
            acc_ref[...] = contrib
        else:
            acc_ref[...] += contrib

    o = acc_ref[...] + b2_ref[...].astype(jnp.float32)
    o_ref[0] = o.astype(o_ref.dtype)


def _round_up(a, m):
    return ((a + m - 1) // m) * m


def feed_forward_3d(x, w1, b1, w2, b2, *, tn=512, inner_chunk=512):
    """FeedForward3D forward pass.

    x:  (b, c, s, h, w)  channel-first, as in the PyTorch module.
    w1: (dim, inner), b1: (inner,)   with y = x @ w1 + b1 convention.
    w2: (inner, dim), b2: (dim,)
    """
    b, c, s, hh, ww = x.shape
    dim = c
    inner = w1.shape[1]
    assert w1.shape == (dim, inner) and w2.shape == (inner, dim)
    assert b1.shape == (inner,) and b2.shape == (dim,)

    n_sp = s * hh * ww
    # Token tile: multiple of 128, no wider than the (padded) token axis.
    tn = max(128, (int(tn) // 128) * 128)
    tn = min(tn, _round_up(n_sp, 128))
    n_pad = _round_up(n_sp, tn)

    # FREE reshape: (b, c, s, h, w) -> (b, dim, N); tokens become the minor
    # (lane) axis, no transpose / extra HBM round-trip.
    xr = x.reshape(b, dim, n_sp)
    if n_pad != n_sp:  # pad tokens only when the count isn't tile-aligned
        xr = jnp.pad(xr, ((0, 0), (0, 0), (0, n_pad - n_sp)))

    # Weights pre-transposed once (tiny, one-time) so both in-kernel matmuls
    # contract over the lhs minor dim; a real model would store them this way.
    w1t = jnp.transpose(w1)            # (inner, dim)
    w2t = jnp.transpose(w2)            # (dim, inner)
    b1c = b1.reshape(inner, 1)
    b2c = b2.reshape(dim, 1)

    # Static chunk size over the inner dim.
    ck = inner_chunk if (inner >= inner_chunk and inner % inner_chunk == 0) else inner

    grid = (b, n_pad // tn)

    itemsize = x.dtype.itemsize
    flops = 4 * b * n_pad * dim * inner            # two matmuls, 2*M*N*K each
    bytes_accessed = (2 * b * n_pad * dim * itemsize          # x in + out
                      + w1.size * w1.dtype.itemsize
                      + w2.size * w2.dtype.itemsize
                      + b1.size * b1.dtype.itemsize
                      + b2.size * b2.dtype.itemsize)

    out_flat = pl.pallas_call(
        partial(_ffn_kernel, ck=ck),
        out_shape=jax.ShapeDtypeStruct((b, dim, n_pad), x.dtype),
        grid=grid,
        in_specs=[
            pl.BlockSpec((1, dim, tn), lambda bi, ti: (bi, 0, ti)),   # X tile
            pl.BlockSpec((inner, dim), lambda bi, ti: (0, 0)),        # W1^T (resident)
            pl.BlockSpec((inner, 1), lambda bi, ti: (0, 0)),          # b1
            pl.BlockSpec((dim, inner), lambda bi, ti: (0, 0)),        # W2^T (resident)
            pl.BlockSpec((dim, 1), lambda bi, ti: (0, 0)),            # b2
        ],
        out_specs=pl.BlockSpec((1, dim, tn), lambda bi, ti: (bi, 0, ti)),
        scratch_shapes=[pltpu.VMEM((dim, tn), jnp.float32)],
        compiler_params=pltpu.CompilerParams(
            dimension_semantics=("parallel", "parallel"),
            vmem_limit_bytes=64 * 1024 * 1024),
        cost_estimate=pl.CostEstimate(
            flops=int(flops),
            transcendentals=int(b * n_pad * inner),
            bytes_accessed=int(bytes_accessed)),
    )(xr, w1t, b1c, w2t, b2c)

    # Drop token padding (no-op when already aligned); FREE reshape back to
    # the channel-first layout -- no transpose needed.
    out = out_flat[:, :, :n_sp].reshape(b, dim, s, hh, ww)
    return out


def _reference(x, w1, b1, w2, b2):
    xt = jnp.transpose(x, (0, 2, 3, 4, 1)).astype(jnp.float32)
    h = jnp.dot(xt, w1.astype(jnp.float32), precision=lax.Precision.HIGHEST)
    h = h + b1.astype(jnp.float32)
    h = 0.5 * h * (1.0 + lax.erf(h * _SQRT_HALF))      # exact GELU reference
    o = jnp.dot(h, w2.astype(jnp.float32), precision=lax.Precision.HIGHEST)
    o = o + b2.astype(jnp.float32)
    return jnp.transpose(o.astype(x.dtype), (0, 4, 1, 2, 3))


if __name__ == "__main__":
    key = jax.random.PRNGKey(0)

    # Shapes consistent with the module's forward: x is (b, c, s, h, w).
    # Token count 4*8*10 = 320 is deliberately NOT a multiple of the token
    # tile so the padding path is exercised; tn=128 gives a (2, 3) grid and
    # inner_chunk=16 exercises the chunked inner-dim accumulation path.
    b, dim, s, h, w = 2, 8, 4, 8, 10
    mult = 4
    inner_dim = int(dim * mult)

    k_x, k_w1, k_b1, k_w2, k_b2 = jax.random.split(key, 5)
    x = jax.random.normal(k_x, (b, dim, s, h, w), dtype=jnp.float32)

    # Deterministic init mimicking nn.Linear (uniform(-1/sqrt(fan_in), +)).
    lim1 = 1.0 / jnp.sqrt(dim)
    lim2 = 1.0 / jnp.sqrt(inner_dim)
    w1 = jax.random.uniform(k_w1, (dim, inner_dim), jnp.float32, -lim1, lim1)
    b1 = jax.random.uniform(k_b1, (inner_dim,), jnp.float32, -lim1, lim1)
    w2 = jax.random.uniform(k_w2, (inner_dim, dim), jnp.float32, -lim2, lim2)
    b2 = jax.random.uniform(k_b2, (dim,), jnp.float32, -lim2, lim2)

    out = feed_forward_3d(x, w1, b1, w2, b2, tn=128, inner_chunk=16)
    out = jax.block_until_ready(out)

    ref = _reference(x, w1, b1, w2, b2)
    assert out.shape == x.shape
    # 1e-4: leaves margin for MXU f32 pass rounding + polynomial-erf GELU
    # (~1e-6), while still catching any semantic error (missing bias, wrong
    # activation, mis-tiled tokens all produce >=1e-2 deviations).
    assert jnp.allclose(out, ref, rtol=1e-4, atol=1e-4), "mismatch vs reference"

    print("KERNEL_OK")
</pallas_src>

<mosaic_0001>
module attributes {stable_mosaic.version = 11 : i64} {
  func.func @_ffn_kernel(%arg0: i32, %arg1: i32, %arg2: memref<1x8x128xf32, #tpu.memory_space<vmem>>, %arg3: memref<32x8xf32, #tpu.memory_space<vmem>>, %arg4: memref<32x1xf32, #tpu.memory_space<vmem>>, %arg5: memref<8x32xf32, #tpu.memory_space<vmem>>, %arg6: memref<8x1xf32, #tpu.memory_space<vmem>>, %arg7: memref<1x8x128xf32, #tpu.memory_space<vmem>>, %arg8: memref<8x128xf32, #tpu.memory_space<vmem>>) attributes {dimension_semantics = [#tpu.dimension_semantics<parallel>, #tpu.dimension_semantics<parallel>], iteration_bounds = array<i64: 2, 3>, scalar_prefetch = 0 : i64, scratch_operands = 1 : i64, tpu.core_type = #tpu.core_type<tc>, window_params = [{transform_indices = @transform_0, window_bounds = array<i64: 1, 8, 128>}, {pipeline_mode = #tpu.pipeline_mode<synchronous>, transform_indices = @transform_1, window_bounds = array<i64: 32, 8>}, {pipeline_mode = #tpu.pipeline_mode<synchronous>, transform_indices = @transform_2, window_bounds = array<i64: 32, 1>}, {pipeline_mode = #tpu.pipeline_mode<synchronous>, transform_indices = @transform_3, window_bounds = array<i64: 8, 32>}, {pipeline_mode = #tpu.pipeline_mode<synchronous>, transform_indices = @transform_4, window_bounds = array<i64: 8, 1>}, {transform_indices = @transform_5, window_bounds = array<i64: 1, 8, 128>}]} {
    %c0 = arith.constant 0 : index
    %c0_0 = arith.constant 0 : index
    %c0_1 = arith.constant 0 : index
    %0 = vector.load %arg2[%c0, %c0_0, %c0_1] : memref<1x8x128xf32, #tpu.memory_space<vmem>>, vector<1x8x128xf32>
    %1 = vector.shape_cast %0 : vector<1x8x128xf32> to vector<8x128xf32>
    %c0_2 = arith.constant 0 : index
    %c0_3 = arith.constant 0 : index
    %2 = vector.load %arg3[%c0_2, %c0_3] : memref<32x8xf32, #tpu.memory_space<vmem>>, vector<16x8xf32>
    %cst = arith.constant dense<0.000000e+00> : vector<16x128xf32>
    %3 = tpu.matmul %2, %1, %cst {dimension_numbers = #tpu.dot_dimension_numbers<[1], [0], [0], [1], [0, 0, 1, 1], [], []>} : vector<16x8xf32>, vector<8x128xf32>, vector<16x128xf32> -> vector<16x128xf32>
    %c0_4 = arith.constant 0 : index
    %c0_5 = arith.constant 0 : index
    %4 = vector.load %arg4[%c0_4, %c0_5] : memref<32x1xf32, #tpu.memory_space<vmem>>, vector<16x1xf32>
    %5 = vector.broadcast %4 : vector<16x1xf32> to vector<16x128xf32>
    %6 = arith.addf %3, %5 : vector<16x128xf32>
    %cst_6 = arith.constant 5.000000e-01 : f32
    %7 = vector.broadcast %cst_6 : f32 to vector<16x128xf32>
    %8 = arith.mulf %7, %6 : vector<16x128xf32>
    %cst_7 = arith.constant 0.707106769 : f32
    %9 = vector.broadcast %cst_7 : f32 to vector<16x128xf32>
    %10 = arith.mulf %6, %9 : vector<16x128xf32>
    %11 = math.absf %10 : vector<16x128xf32>
    %cst_8 = arith.constant 0.327591091 : f32
    %12 = vector.broadcast %cst_8 : f32 to vector<16x128xf32>
    %13 = arith.mulf %12, %11 : vector<16x128xf32>
    %cst_9 = arith.constant 1.000000e+00 : f32
    %14 = vector.broadcast %cst_9 : f32 to vector<16x128xf32>
    %15 = arith.addf %14, %13 : vector<16x128xf32>
    %cst_10 = arith.constant 1.000000e+00 : f32
    %16 = vector.broadcast %cst_10 : f32 to vector<16x128xf32>
    %17 = arith.divf %16, %15 : vector<16x128xf32>
    %cst_11 = arith.constant 1.06140542 : f32
    %18 = vector.broadcast %cst_11 : f32 to vector<16x128xf32>
    %19 = arith.mulf %18, %17 : vector<16x128xf32>
    %cst_12 = arith.constant -1.45315206 : f32
    %20 = vector.broadcast %cst_12 : f32 to vector<16x128xf32>
    %21 = arith.addf %19, %20 : vector<16x128xf32>
    %22 = arith.mulf %21, %17 : vector<16x128xf32>
    %cst_13 = arith.constant 1.42141378 : f32
    %23 = vector.broadcast %cst_13 : f32 to vector<16x128xf32>
    %24 = arith.addf %22, %23 : vector<16x128xf32>
    %25 = arith.mulf %24, %17 : vector<16x128xf32>
    %cst_14 = arith.constant -0.284496725 : f32
    %26 = vector.broadcast %cst_14 : f32 to vector<16x128xf32>
    %27 = arith.addf %25, %26 : vector<16x128xf32>
    %28 = arith.mulf %27, %17 : vector<16x128xf32>
    %cst_15 = arith.constant 0.254829586 : f32
    %29 = vector.broadcast %cst_15 : f32 to vector<16x128xf32>
    %30 = arith.addf %28, %29 : vector<16x128xf32>
    %31 = arith.mulf %30, %17 : vector<16x128xf32>
    %cst_16 = arith.constant 0.000000e+00 : f32
    %32 = vector.broadcast %cst_16 : f32 to vector<16x128xf32>
    %33 = arith.subf %32, %11 : vector<16x128xf32>
    %34 = arith.mulf %33, %11 : vector<16x128xf32>
    %35 = math.exp %34 : vector<16x128xf32>
    %36 = arith.mulf %31, %35 : vector<16x128xf32>
    %cst_17 = arith.constant 1.000000e+00 : f32
    %37 = vector.broadcast %cst_17 : f32 to vector<16x128xf32>
    %38 = arith.subf %37, %36 : vector<16x128xf32>
    %cst_18 = arith.constant 0.000000e+00 : f32
    %39 = vector.broadcast %cst_18 : f32 to vector<16x128xf32>
    %40 = arith.cmpf olt, %10, %39 : vector<16x128xf32>
    %cst_19 = arith.constant 0.000000e+00 : f32
    %41 = vector.broadcast %cst_19 : f32 to vector<16x128xf32>
    %42 = arith.subf %41, %38 : vector<16x128xf32>
    %43 = arith.select %40, %42, %38 : vector<16x128xi1>, vector<16x128xf32>
    %cst_20 = arith.constant 1.000000e+00 : f32
    %44 = vector.broadcast %cst_20 : f32 to vector<16x128xf32>
    %45 = arith.addf %44, %43 : vector<16x128xf32>
    %46 = arith.mulf %8, %45 : vector<16x128xf32>
    %c0_21 = arith.constant 0 : index
    %c0_22 = arith.constant 0 : index
    %47 = vector.load %arg5[%c0_21, %c0_22] : memref<8x32xf32, #tpu.memory_space<vmem>>, vector<8x16xf32>
    %cst_23 = arith.constant dense<0.000000e+00> : vector<8x128xf32>
    %48 = tpu.matmul %47, %46, %cst_23 {dimension_numbers = #tpu.dot_dimension_numbers<[1], [0], [0], [1], [0, 0, 1, 1], [], []>} : vector<8x16xf32>, vector<16x128xf32>, vector<8x128xf32> -> vector<8x128xf32>
    %c0_24 = arith.constant 0 : index
    %c0_25 = arith.constant 0 : index
    %49 = vector.load %arg8[%c0_24, %c0_25] : memref<8x128xf32, #tpu.memory_space<vmem>>, vector<8x128xf32>
    tpu.vector_store %arg8[%c0_24, %c0_25], %48 {strides = array<i32>} : memref<8x128xf32, #tpu.memory_space<vmem>>, vector<8x128xf32>,
    %c16 = arith.constant 16 : index
    %c0_26 = arith.constant 0 : index
    %50 = vector.load %arg3[%c16, %c0_26] : memref<32x8xf32, #tpu.memory_space<vmem>>, vector<16x8xf32>
    %cst_27 = arith.constant dense<0.000000e+00> : vector<16x128xf32>
    %51 = tpu.matmul %50, %1, %cst_27 {dimension_numbers = #tpu.dot_dimension_numbers<[1], [0], [0], [1], [0, 0, 1, 1], [], []>} : vector<16x8xf32>, vector<8x128xf32>, vector<16x128xf32> -> vector<16x128xf32>
    %c16_28 = arith.constant 16 : index
    %c0_29 = arith.constant 0 : index
    %52 = vector.load %arg4[%c16_28, %c0_29] : memref<32x1xf32, #tpu.memory_space<vmem>>, vector<16x1xf32>
    %53 = vector.broadcast %52 : vector<16x1xf32> to vector<16x128xf32>
    %54 = arith.addf %51, %53 : vector<16x128xf32>
    %cst_30 = arith.constant 5.000000e-01 : f32
    %55 = vector.broadcast %cst_30 : f32 to vector<16x128xf32>
    %56 = arith.mulf %55, %54 : vector<16x128xf32>
    %cst_31 = arith.constant 0.707106769 : f32
    %57 = vector.broadcast %cst_31 : f32 to vector<16x128xf32>
    %58 = arith.mulf %54, %57 : vector<16x128xf32>
    %59 = math.absf %58 : vector<16x128xf32>
    %cst_32 = arith.constant 0.327591091 : f32
    %60 = vector.broadcast %cst_32 : f32 to vector<16x128xf32>
    %61 = arith.mulf %60, %59 : vector<16x128xf32>
    %cst_33 = arith.constant 1.000000e+00 : f32
    %62 = vector.broadcast %cst_33 : f32 to vector<16x128xf32>
    %63 = arith.addf %62, %61 : vector<16x128xf32>
    %cst_34 = arith.constant 1.000000e+00 : f32
    %64 = vector.broadcast %cst_34 : f32 to vector<16x128xf32>
    %65 = arith.divf %64, %63 : vector<16x128xf32>
    %cst_35 = arith.constant 1.06140542 : f32
    %66 = vector.broadcast %cst_35 : f32 to vector<16x128xf32>
    %67 = arith.mulf %66, %65 : vector<16x128xf32>
    %cst_36 = arith.constant -1.45315206 : f32
    %68 = vector.broadcast %cst_36 : f32 to vector<16x128xf32>
    %69 = arith.addf %67, %68 : vector<16x128xf32>
    %70 = arith.mulf %69, %65 : vector<16x128xf32>
    %cst_37 = arith.constant 1.42141378 : f32
    %71 = vector.broadcast %cst_37 : f32 to vector<16x128xf32>
    %72 = arith.addf %70, %71 : vector<16x128xf32>
    %73 = arith.mulf %72, %65 : vector<16x128xf32>
    %cst_38 = arith.constant -0.284496725 : f32
    %74 = vector.broadcast %cst_38 : f32 to vector<16x128xf32>
    %75 = arith.addf %73, %74 : vector<16x128xf32>
    %76 = arith.mulf %75, %65 : vector<16x128xf32>
    %cst_39 = arith.constant 0.254829586 : f32
    %77 = vector.broadcast %cst_39 : f32 to vector<16x128xf32>
    %78 = arith.addf %76, %77 : vector<16x128xf32>
    %79 = arith.mulf %78, %65 : vector<16x128xf32>
    %cst_40 = arith.constant 0.000000e+00 : f32
    %80 = vector.broadcast %cst_40 : f32 to vector<16x128xf32>
    %81 = arith.subf %80, %59 : vector<16x128xf32>
    %82 = arith.mulf %81, %59 : vector<16x128xf32>
    %83 = math.exp %82 : vector<16x128xf32>
    %84 = arith.mulf %79, %83 : vector<16x128xf32>
    %cst_41 = arith.constant 1.000000e+00 : f32
    %85 = vector.broadcast %cst_41 : f32 to vector<16x128xf32>
    %86 = arith.subf %85, %84 : vector<16x128xf32>
    %cst_42 = arith.constant 0.000000e+00 : f32
    %87 = vector.broadcast %cst_42 : f32 to vector<16x128xf32>
    %88 = arith.cmpf olt, %58, %87 : vector<16x128xf32>
    %cst_43 = arith.constant 0.000000e+00 : f32
    %89 = vector.broadcast %cst_43 : f32 to vector<16x128xf32>
    %90 = arith.subf %89, %86 : vector<16x128xf32>
    %91 = arith.select %88, %90, %86 : vector<16x128xi1>, vector<16x128xf32>
    %cst_44 = arith.constant 1.000000e+00 : f32
    %92 = vector.broadcast %cst_44 : f32 to vector<16x128xf32>
    %93 = arith.addf %92, %91 : vector<16x128xf32>
    %94 = arith.mulf %56, %93 : vector<16x128xf32>
    %c0_45 = arith.constant 0 : index
    %c16_46 = arith.constant 16 : index
    %95 = vector.load %arg5[%c0_45, %c16_46] : memref<8x32xf32, #tpu.memory_space<vmem>>, vector<8x16xf32>
    %cst_47 = arith.constant dense<0.000000e+00> : vector<8x128xf32>
    %96 = tpu.matmul %95, %94, %cst_47 {dimension_numbers = #tpu.dot_dimension_numbers<[1], [0], [0], [1], [0, 0, 1, 1], [], []>} : vector<8x16xf32>, vector<16x128xf32>, vector<8x128xf32> -> vector<8x128xf32>
    %c0_48 = arith.constant 0 : index
    %c0_49 = arith.constant 0 : index
    %97 = vector.load %arg8[%c0_48, %c0_49] : memref<8x128xf32, #tpu.memory_space<vmem>>, vector<8x128xf32>
    %98 = arith.addf %97, %96 : vector<8x128xf32>
    %c0_50 = arith.constant 0 : index
    %c0_51 = arith.constant 0 : index
    %99 = vector.load %arg8[%c0_50, %c0_51] : memref<8x128xf32, #tpu.memory_space<vmem>>, vector<8x128xf32>
    tpu.vector_store %arg8[%c0_50, %c0_51], %98 {strides = array<i32>} : memref<8x128xf32, #tpu.memory_space<vmem>>, vector<8x128xf32>,
    %c0_52 = arith.constant 0 : index
    %c0_53 = arith.constant 0 : index
    %100 = vector.load %arg8[%c0_52, %c0_53] : memref<8x128xf32, #tpu.memory_space<vmem>>, vector<8x128xf32>
    %c0_54 = arith.constant 0 : index
    %c0_55 = arith.constant 0 : index
    %101 = vector.load %arg6[%c0_54, %c0_55] : memref<8x1xf32, #tpu.memory_space<vmem>>, vector<8x1xf32>
    %102 = vector.broadcast %101 : vector<8x1xf32> to vector<8x128xf32>
    %103 = arith.addf %100, %102 : vector<8x128xf32>
    %c0_56 = arith.constant 0 : index
    %c0_57 = arith.constant 0 : index
    %c0_58 = arith.constant 0 : index
    %104 = vector.load %arg7[%c0_56, %c0_57, %c0_58] : memref<1x8x128xf32, #tpu.memory_space<vmem>>, vector<1x8x128xf32>
    %105 = vector.shape_cast %104 : vector<1x8x128xf32> to vector<8x128xf32>
    %106 = vector.shape_cast %103 : vector<8x128xf32> to vector<1x8x128xf32>
    tpu.vector_store %arg7[%c0_56, %c0_57, %c0_58], %106 {strides = array<i32>} : memref<1x8x128xf32, #tpu.memory_space<vmem>>, vector<1x8x128xf32>,
    return
  }
  func.func @transform_0(%arg0: i32, %arg1: i32) -> (i32, i32, i32) {
    %c0_i32 = arith.constant 0 : i32
    %c0_i32_0 = arith.constant 0 : i32
    return %arg0, %c0_i32, %arg1 : i32, i32, i32
  }
  func.func @transform_1(%arg0: i32, %arg1: i32) -> (i32, i32) {
    %c0_i32 = arith.constant 0 : i32
    %c0_i32_0 = arith.constant 0 : i32
    %c0_i32_1 = arith.constant 0 : i32
    return %c0_i32, %c0_i32_0 : i32, i32
  }
  func.func @transform_2(%arg0: i32, %arg1: i32) -> (i32, i32) {
    %c0_i32 = arith.constant 0 : i32
    %c0_i32_0 = arith.constant 0 : i32
    %c0_i32_1 = arith.constant 0 : i32
    return %c0_i32, %c0_i32_0 : i32, i32
  }
  func.func @transform_3(%arg0: i32, %arg1: i32) -> (i32, i32) {
    %c0_i32 = arith.constant 0 : i32
    %c0_i32_0 = arith.constant 0 : i32
    %c0_i32_1 = arith.constant 0 : i32
    return %c0_i32, %c0_i32_0 : i32, i32
  }
  func.func @transform_4(%arg0: i32, %arg1: i32) -> (i32, i32) {
    %c0_i32 = arith.constant 0 : i32
    %c0_i32_0 = arith.constant 0 : i32
    %c0_i32_1 = arith.constant 0 : i32
    return %c0_i32, %c0_i32_0 : i32, i32
  }
  func.func @transform_5(%arg0: i32, %arg1: i32) -> (i32, i32, i32) {
    %c0_i32 = arith.constant 0 : i32
    %c0_i32_0 = arith.constant 0 : i32
    return %arg0, %c0_i32, %arg1 : i32, i32, i32
  }
}

</mosaic_0001>

<llo_original>
// kernel: tpu_custom_call.1
$region0: #{tpu_custom_call.1}
  #allocation0 [shape = 'u32[]', space=smem, size = 0x4, offset = 0x4, fixed_abs, tag = 'smem constant byte address 0x4 - core index']
  #allocation1 [shape = 'u32[144,128]{1,0:T(1,128)}', space=vmem, size = 0x12000, scoped, tag = 'internal scratch']
  #allocation2 [shape = 'f32[8,128]{1,0:T(8,128)}', space=vmem, size = 0x1000, scoped, tag = 'scratch operand']
  %s0 = inlined_call_operand.hbm [shape: f32[2,8,384], index: 0, kind: input, shape index: {}]
  %s1 = inlined_call_operand.hbm [shape: f32[32,8], index: 1, kind: input, shape index: {}]
  %s2 = inlined_call_operand.hbm [shape: f32[32,1], index: 2, kind: input, shape index: {}]
  %s3 = inlined_call_operand.hbm [shape: f32[8,32], index: 3, kind: input, shape index: {}]
  %s4 = inlined_call_operand.hbm [shape: f32[8,1], index: 4, kind: input, shape index: {}]
  %s5 = inlined_call_operand.hbm [shape: f32[2,8,384], index: 5, kind: output, shape index: {}]
  %s6 = sld [smem:[#allocation0]]
  $region73: #{tpu_custom_call.1} parent=0
    _
  %s8 = ssub.s32 1, %s6
  %s9 = scalar_select 0, %s8, %s6
  $region1: #{tpu_custom_call.1} parent=0
    #allocation3 [shape = 'u8[8192]{0}', space=vmem, size = 0x2000, scoped, tag = 'input window, operand 0']
    #allocation4 [shape = 's32[2]{0}', space=sflag, size = 0x8, scoped, tag = 'scoped memory for tpu_custom_call.1']
    #allocation5 [shape = 's32[2]{0}', space=sflag, size = 0x8, scoped, tag = 'scoped memory for tpu_custom_call.1']
    #allocation6 [shape = 'u8[16384]{0}', space=vmem, size = 0x4000, scoped, tag = 'input window, operand 1, single buffered']
    #allocation7 [shape = 's32[1]{0}', space=sflag, size = 0x4, scoped, tag = 'scoped memory for tpu_custom_call.1']
    #allocation8 [shape = 'u8[16384]{0}', space=vmem, size = 0x4000, scoped, tag = 'input window, operand 2, single buffered']
    #allocation9 [shape = 'u8[4096]{0}', space=vmem, size = 0x1000, scoped, tag = 'input window, operand 3, single buffered']
    #allocation10 [shape = 's32[1]{0}', space=sflag, size = 0x4, scoped, tag = 'scoped memory for tpu_custom_call.1']
    #allocation11 [shape = 'u8[4096]{0}', space=vmem, size = 0x1000, scoped, tag = 'input window, operand 4, single buffered']
    #allocation12 [shape = 'u8[8192]{0}', space=vmem, size = 0x2000, scoped, tag = 'output window, operand 0']
    %10 = vsyncpa [#allocation4], 0
    %s11 = scalar_lea.sflag [#allocation4], 1
    %12 = vsyncpa %s11, 0
    %13 = vsyncpa [#allocation7], 0
    %14 = vsyncpa [#allocation10], 0
    %15 = vsyncpa [#allocation5], 0
    %s16 = scalar_lea.sflag [#allocation5], 1
    %17 = vsyncpa %s16, 0
    loop: start=0, step=1, limit=8
    $region2: #{tpu_custom_call.1} parent=1 // loop_pre_header
      _
    $region3: #{tpu_custom_call.1} parent=1 // loop_header
      %s19 = sphi 0, %s23
      %p20 = scmp.ge.s32.totalorder %s19, 8
      %s26 = sphi 0, %s38
      %s27 = sphi 0, %s34
      %s28 = sphi 0, %s26
      %s29 = sphi 0, %s27
      %s30 = sphi 0, %s28
      %s31 = sphi 0, %s29
      %s43 = sphi 0, %s45
      %s46 = sphi 0, %s43
      %s47 = sphi 0, %s46
      %s63 = sphi 0, %s47
      %s67 = sphi 0, %s67
      %s69 = sphi 0, %s67
      %s70 = sphi 0, %s69
      %s84 = sphi 0, %s70
      %s88 = sphi 0, %s88
      %s90 = sphi 0, %s88
      %s91 = sphi 0, %s90
      %s105 = sphi 0, %s91
      %s109 = sphi 0, %s109
      %s111 = sphi 0, %s109
      %s112 = sphi 0, %s111
      %s126 = sphi 0, %s112
      %s130 = sphi 0, %s130
      %s132 = sphi 0, %s130
      %s133 = sphi 0, %s132
      %s147 = sphi 0, %s133
      %s155 = sphi 0, %s157
      %s158 = sphi 0, %s155
      %s159 = sphi 0, %s158
      %s175 = sphi 0, %s159
    $region4: #{tpu_custom_call.1} parent=1 // loop_header_branch
      %22 = sbr.rel (%p20) target = $region8
    $region5: #{tpu_custom_call.1} parent=1 // loop_body
      %s24 = ssub.s32 %s19, 1
      %s25 = ssub.s32 %s19, 2
      %s32 = sadd.s32 1, %s27
      %p33 = scmp.ge.s32.totalorder %s32, 3
      %s34 = scalar_select %p33, 0, %s32
      %s35 = sadd.s32 1, %s26
      %s36 = scalar_select %p33, %s35, %s26
      %p37 = scmp.ge.s32.totalorder %s36, 2
      %s38 = scalar_select %p37, 0, %s36
      %s39 = ssub.s32 %s26, %s38
      %s40 = ssub.s32 %s27, %s34
      %s41 = sor.u32 %s39, %s40
      %p42 = scmp.eq.s32.totalorder %s41, 0
      %s44 = sadd.s32 %s43, 1
      %s45 = scalar_select %p42, %s43, %s44
      %p48 = pneg %p42
      %p49 = scmp.eq.s32.totalorder %s19, 5
      %p50 = por %p48, %p49
      %p51 = scmp.ne.s32.totalorder %s43, %s46
      %p52 = scmp.eq.s32.totalorder %s19, 0
      %p53 = por %p51, %p52
      %p54 = scmp.ne.s32.totalorder %s43, %s46
      %p55 = scmp.eq.s32.totalorder %s24, 5
      %p56 = por %p54, %p55
      %p57 = scmp.ne.s32.totalorder %s46, %s47
      %p58 = scmp.eq.s32.totalorder %s24, 0
      %p59 = por %p57, %p58
      %p60 = scmp.ne.s32.totalorder %s46, %s47
      %p61 = scmp.eq.s32.totalorder %s25, 5
      %p62 = por %p60, %p61
      %p64 = scmp.ne.s32.totalorder %s47, %s63
      %p65 = scmp.eq.s32.totalorder %s25, 0
      %p66 = por %p64, %p65
      %s68 = sadd.s32 %s67, 1
      %p71 = scmp.eq.s32.totalorder %s19, 5
      %p72 = scmp.ne.s32.totalorder %s67, %s69
      %p73 = scmp.eq.s32.totalorder %s19, 0
      %p74 = por %p72, %p73
      %p75 = scmp.ne.s32.totalorder %s67, %s69
      %p76 = scmp.eq.s32.totalorder %s24, 5
      %p77 = por %p75, %p76
      %p78 = scmp.ne.s32.totalorder %s69, %s70
      %p79 = scmp.eq.s32.totalorder %s24, 0
      %p80 = por %p78, %p79
      %p81 = scmp.ne.s32.totalorder %s69, %s70
      %p82 = scmp.eq.s32.totalorder %s25, 5
      %p83 = por %p81, %p82
      %p85 = scmp.ne.s32.totalorder %s70, %s84
      %p86 = scmp.eq.s32.totalorder %s25, 0
      %p87 = por %p85, %p86
      %s89 = sadd.s32 %s88, 1
      %p92 = scmp.eq.s32.totalorder %s19, 5
      %p93 = scmp.ne.s32.totalorder %s88, %s90
      %p94 = scmp.eq.s32.totalorder %s19, 0
      %p95 = por %p93, %p94
      %p96 = scmp.ne.s32.totalorder %s88, %s90
      %p97 = scmp.eq.s32.totalorder %s24, 5
      %p98 = por %p96, %p97
      %p99 = scmp.ne.s32.totalorder %s90, %s91
      %p100 = scmp.eq.s32.totalorder %s24, 0
      %p101 = por %p99, %p100
      %p102 = scmp.ne.s32.totalorder %s90, %s91
      %p103 = scmp.eq.s32.totalorder %s25, 5
      %p104 = por %p102, %p103
      %p106 = scmp.ne.s32.totalorder %s91, %s105
      %p107 = scmp.eq.s32.totalorder %s25, 0
      %p108 = por %p106, %p107
      %s110 = sadd.s32 %s109, 1
      %p113 = scmp.eq.s32.totalorder %s19, 5
      %p114 = scmp.ne.s32.totalorder %s109, %s111
      %p115 = scmp.eq.s32.totalorder %s19, 0
      %p116 = por %p114, %p115
      %p117 = scmp.ne.s32.totalorder %s109, %s111
      %p118 = scmp.eq.s32.totalorder %s24, 5
      %p119 = por %p117, %p118
      %p120 = scmp.ne.s32.totalorder %s111, %s112
      %p121 = scmp.eq.s32.totalorder %s24, 0
      %p122 = por %p120, %p121
      %p123 = scmp.ne.s32.totalorder %s111, %s112
      %p124 = scmp.eq.s32.totalorder %s25, 5
      %p125 = por %p123, %p124
      %p127 = scmp.ne.s32.totalorder %s112, %s126
      %p128 = scmp.eq.s32.totalorder %s25, 0
      %p129 = por %p127, %p128
      %s131 = sadd.s32 %s130, 1
      %p134 = scmp.eq.s32.totalorder %s19, 5
      %p135 = scmp.ne.s32.totalorder %s130, %s132
      %p136 = scmp.eq.s32.totalorder %s19, 0
      %p137 = por %p135, %p136
      %p138 = scmp.ne.s32.totalorder %s130, %s132
      %p139 = scmp.eq.s32.totalorder %s24, 5
      %p140 = por %p138, %p139
      %p141 = scmp.ne.s32.totalorder %s132, %s133
      %p142 = scmp.eq.s32.totalorder %s24, 0
      %p143 = por %p141, %p142
      %p144 = scmp.ne.s32.totalorder %s132, %s133
      %p145 = scmp.eq.s32.totalorder %s25, 5
      %p146 = por %p144, %p145
      %p148 = scmp.ne.s32.totalorder %s133, %s147
      %p149 = scmp.eq.s32.totalorder %s25, 0
      %p150 = por %p148, %p149
      %s151 = ssub.s32 %s26, %s38
      %s152 = ssub.s32 %s27, %s34
      %s153 = sor.u32 %s151, %s152
      %p154 = scmp.eq.s32.totalorder %s153, 0
      %s156 = sadd.s32 %s155, 1
      %s157 = scalar_select %p154, %s155, %s156
      %p160 = pneg %p154
      %p161 = scmp.eq.s32.totalorder %s19, 5
      %p162 = por %p160, %p161
      %p163 = scmp.ne.s32.totalorder %s155, %s158
      %p164 = scmp.eq.s32.totalorder %s19, 0
      %p165 = por %p163, %p164
      %p166 = scmp.ne.s32.totalorder %s155, %s158
      %p167 = scmp.eq.s32.totalorder %s24, 5
      %p168 = por %p166, %p167
      %p169 = scmp.ne.s32.totalorder %s158, %s159
      %p170 = scmp.eq.s32.totalorder %s24, 0
      %p171 = por %p169, %p170
      %p172 = scmp.ne.s32.totalorder %s158, %s159
      %p173 = scmp.eq.s32.totalorder %s25, 5
      %p174 = por %p172, %p173
      %p176 = scmp.ne.s32.totalorder %s159, %s175
      %p177 = scmp.eq.s32.totalorder %s25, 0
      %p178 = por %p176, %p177
      %p179 = scmp.le.s32.totalorder 1, %s19
      %p180 = scmp.lt.s32.totalorder %s19, 7
      %p181 = pnand %p179, %p180
      %p182 = pneg %p181
      // Predicated region
      $region9: #{tpu_custom_call.1} parent=5 // pred_check
        _
      $region10: #{tpu_custom_call.1} parent=5 // pred_check_branch
        %184 = sbr.rel (%p181) target = $region12
      $region11: #{tpu_custom_call.1} parent=5 // pred_region
        %s185 = ssub.s32 %s19, 1
        // Predicated region
        $region13: #{tpu_custom_call.1} parent=11 // pred_check
          %p186 = pneg %p80
        $region14: #{tpu_custom_call.1} parent=11 // pred_check_branch
          %188 = sbr.rel (%p186) target = $region16
        $region15: #{tpu_custom_call.1} parent=11 // pred_region
          %s190 = ssub.s32 512, 512
          %191 = vsyncadd [#allocation7], %s190
          %s192 = sshll.u32 [#allocation6], 4
          %s193 = int_to_ptr.vmem [resolvable:$true] %s192
          %198 = dma.hbm_to_vmem [thread:$0]  %s1, 512, %s193, [#allocation7], 128, 128, 8
        $region16: #{tpu_custom_call.1} parent=11 // pred_fallthru
          _
        // Predicated region
        $region17: #{tpu_custom_call.1} parent=11 // pred_check
          %p199 = pneg %p101
        $region18: #{tpu_custom_call.1} parent=11 // pred_check_branch
          %201 = sbr.rel (%p199) target = $region20
        $region19: #{tpu_custom_call.1} parent=11 // pred_region
          %s203 = ssub.s32 512, 512
          %204 = vsyncadd [#allocation7], %s203
          %s205 = sshll.u32 [#allocation8], 4
          %s206 = int_to_ptr.vmem [resolvable:$true] %s205
          %211 = dma.hbm_to_vmem [thread:$0]  %s2, 512, %s206, [#allocation7], 128, 128, 8
        $region20: #{tpu_custom_call.1} parent=11 // pred_fallthru
          _
        // Predicated region
        $region21: #{tpu_custom_call.1} parent=11 // pred_check
          %p212 = pneg %p122
        $region22: #{tpu_custom_call.1} parent=11 // pred_check_branch
          %214 = sbr.rel (%p212) target = $region24
        $region23: #{tpu_custom_call.1} parent=11 // pred_region
          %s216 = ssub.s32 128, 128
          %217 = vsyncadd [#allocation10], %s216
          %s219 = sshll.u32 [#allocation9], 4
          %s220 = int_to_ptr.vmem [resolvable:$true] %s219
          %222 = dma.hbm_to_vmem [thread:$0]  %s3, 128, %s220, [#allocation10]
        $region24: #{tpu_custom_call.1} parent=11 // pred_fallthru
          _
        // Predicated region
        $region25: #{tpu_custom_call.1} parent=11 // pred_check
          %p223 = pneg %p143
        $region26: #{tpu_custom_call.1} parent=11 // pred_check_branch
          %225 = sbr.rel (%p223) target = $region28
        $region27: #{tpu_custom_call.1} parent=11 // pred_region
          %s227 = ssub.s32 128, 128
          %228 = vsyncadd [#allocation10], %s227
          %s230 = sshll.u32 [#allocation11], 4
          %s231 = int_to_ptr.vmem [resolvable:$true] %s230
          %233 = dma.hbm_to_vmem [thread:$0]  %s4, 128, %s231, [#allocation10]
        $region28: #{tpu_custom_call.1} parent=11 // pred_fallthru
          _
      $region12: #{tpu_custom_call.1} parent=5 // pred_fallthru
        _
      %p234 = scmp.lt.s32.totalorder %s19, 6
      // Predicated region
      $region29: #{tpu_custom_call.1} parent=5 // pred_check
        %p235 = pneg %p234
      $region30: #{tpu_custom_call.1} parent=5 // pred_check_branch
        %237 = sbr.rel (%p235) target = $region32
      $region31: #{tpu_custom_call.1} parent=5 // pred_region
        // Predicated region
        $region33: #{tpu_custom_call.1} parent=31 // pred_check
          %p238 = pneg %p53
        $region34: #{tpu_custom_call.1} parent=31 // pred_check_branch
          %240 = sbr.rel (%p238) target = $region36
        $region35: #{tpu_custom_call.1} parent=31 // pred_region
          %s241 = sand.u32 %s43, 1
          %s242 = scalar_lea.sflag [#allocation4], %s241
          %s243 = sand.u32 %s43, 1
          %s244 = smul.addr %s243, 8
          %s245 = scalar_lea.vmem [#allocation3], %s244
          %s247 = ssub.s32 128, 128
          %248 = vsyncadd %s242, %s247
          %s249 = smul.addr %s26, 3
          %s250 = sadd.s32 %s27, %s249
          %s251 = smul.addr %s250, 128
          %s252 = scalar_lea.hbm %s0, %s251
          %s254 = sshll.u32 %s245, 4
          %s255 = int_to_ptr.vmem [resolvable:$true] %s254
          %257 = dma.hbm_to_vmem [thread:$0]  %s252, 128, %s255, %s242
        $region36: #{tpu_custom_call.1} parent=31 // pred_fallthru
          _
      $region32: #{tpu_custom_call.1} parent=5 // pred_fallthru
        _
      %p258 = scmp.le.s32.totalorder 1, %s19
      %p259 = scmp.lt.s32.totalorder %s19, 7
      %p260 = pnand %p258, %p259
      %p261 = pneg %p260
      // Predicated region
      $region37: #{tpu_custom_call.1} parent=5 // pred_check
        _
      $region38: #{tpu_custom_call.1} parent=5 // pred_check_branch
        %263 = sbr.rel (%p260) target = $region40
      $region39: #{tpu_custom_call.1} parent=5 // pred_region
        %s264 = ssub.s32 %s19, 1
        %s265 = sand.u32 %s46, 1
        %s266 = scalar_lea.sflag [#allocation4], %s265
        %s267 = sand.u32 %s46, 1
        %s268 = smul.addr %s267, 8
        %s269 = scalar_lea.vmem [#allocation3], %s268
        // Predicated region
        $region41: #{tpu_custom_call.1} parent=39 // pred_check
          %p270 = pneg %p59
        $region42: #{tpu_custom_call.1} parent=39 // pred_check_branch
          %272 = sbr.rel (%p270) target = $region44
        $region43: #{tpu_custom_call.1} parent=39 // pred_region
          %273 = dma.done %s266, 128
        $region44: #{tpu_custom_call.1} parent=39 // pred_fallthru
          _
        // Predicated region
        $region45: #{tpu_custom_call.1} parent=39 // pred_check
          %p274 = pneg %p80
        $region46: #{tpu_custom_call.1} parent=39 // pred_check_branch
          %276 = sbr.rel (%p274) target = $region48
        $region47: #{tpu_custom_call.1} parent=39 // pred_region
          %277 = dma.done [#allocation7], 512
        $region48: #{tpu_custom_call.1} parent=39 // pred_fallthru
          _
        // Predicated region
        $region49: #{tpu_custom_call.1} parent=39 // pred_check
          %p278 = pneg %p101
        $region50: #{tpu_custom_call.1} parent=39 // pred_check_branch
          %280 = sbr.rel (%p278) target = $region52
        $region51: #{tpu_custom_call.1} parent=39 // pred_region
          %281 = dma.done [#allocation7], 512
        $region52: #{tpu_custom_call.1} parent=39 // pred_fallthru
          _
        // Predicated region
        $region53: #{tpu_custom_call.1} parent=39 // pred_check
          %p282 = pneg %p122
        $region54: #{tpu_custom_call.1} parent=39 // pred_check_branch
          %284 = sbr.rel (%p282) target = $region56
        $region55: #{tpu_custom_call.1} parent=39 // pred_region
          %285 = dma.done [#allocation10], 128
        $region56: #{tpu_custom_call.1} parent=39 // pred_fallthru
          _
        // Predicated region
        $region57: #{tpu_custom_call.1} parent=39 // pred_check
          %p286 = pneg %p143
        $region58: #{tpu_custom_call.1} parent=39 // pred_check_branch
          %288 = sbr.rel (%p286) target = $region60
        $region59: #{tpu_custom_call.1} parent=39 // pred_region
          %289 = dma.done [#allocation10], 128
        $region60: #{tpu_custom_call.1} parent=39 // pred_fallthru
          _
        %s290 = sand.u32 %s46, 1
        %s291 = scalar_lea.sflag [#allocation4], %s290
        %s292 = sand.u32 %s46, 1
        %s293 = smul.addr %s292, 8
        %s294 = scalar_lea.vmem [#allocation3], %s293
        %p295 = pneg %p59
        %p296 = pneg %p56
        %p297 = pneg %p80
        %p298 = pneg %p77
        %p299 = pneg %p101
        %p300 = pneg %p98
        %p301 = pneg %p122
        %p302 = pneg %p119
        %p303 = pneg %p143
        %p304 = pneg %p140
        %p305 = pneg %p171
        %p306 = pneg %p168
        %s307 = sand.u32 %s158, 1
        %s308 = scalar_lea.sflag [#allocation5], %s307
        %s309 = sand.u32 %s158, 1
        %s310 = smul.addr %s309, 8
        %s311 = scalar_lea.vmem [#allocation12], %s310
        %v312 = vld [vmem:[%s269] sm:$0xff]
        %v313 = vld [vmem:[#allocation6] sm:$0xff]
        %v314 = vld [vmem:[#allocation6 + $0x8] sm:$0xff]
        %v315 = vld [vmem:[#allocation8] sm:$0xff]
        %v316 = vld [vmem:[#allocation8 + $0x8] sm:$0xff]
        %318 = vset.pattern.permute.xlu0 0
        %319 = vperm.xlu0 %318, %v315
        %v320 = vpop.permute.xlu0 %319
        %323 = vset.pattern.permute.xlu0 0
        %324 = vperm.xlu0 %323, %v316
        %v325 = vpop.permute.xlu0 %324
        %vm327 = vcmask 64512
        %v329 = vsel %vm327, %v313, 0
        %v332 = vsel %vm327, %v314, 0
        %334 = vmatprep.subr.mxu0 0.0
        %335 = vmatpush1.msra.mxu0 %v312
        %336 = vmatprep.subr.mxu0 0.0
        %337 = vmatpush1.msra.mxu0 0.0
        %338 = vmatprep.subr.mxu0 0.0
        %339 = vmatpush1.msra.mxu0 0.0
        %340 = vmatprep.subr.mxu0 0.0
        %341 = vmatpush1.msra.mxu0 0.0
        %342 = vmatprep.subr.mxu0 0.0
        %343 = vmatpush1.msra.mxu0 0.0
        %344 = vmatprep.subr.mxu0 0.0
        %345 = vmatpush1.msra.mxu0 0.0
        %346 = vmatprep.subr.mxu0 0.0
        %347 = vmatpush1.msra.mxu0 0.0
        %348 = vmatprep.subr.mxu0 0.0
        %349 = vmatpush1.msra.mxu0 0.0
        %350 = vmatprep.subr.mxu0 0.0
        %351 = vmatpush1.msra.mxu0 0.0
        %352 = vmatprep.subr.mxu0 0.0
        %353 = vmatpush1.msra.mxu0 0.0
        %354 = vmatprep.subr.mxu0 0.0
        %355 = vmatpush1.msra.mxu0 0.0
        %356 = vmatprep.subr.mxu0 0.0
        %357 = vmatpush1.msra.mxu0 0.0
        %358 = vmatprep.subr.mxu0 0.0
        %359 = vmatpush1.msra.mxu0 0.0
        %360 = vmatprep.subr.mxu0 0.0
        %361 = vmatpush1.msra.mxu0 0.0
        %362 = vmatprep.subr.mxu0 0.0
        %363 = vmatpush1.msra.mxu0 0.0
        %364 = vmatprep.subr.mxu0 0.0
        %365 = vmatpush1.msra.mxu0 0.0
        %366 = vmatprep.subr.mxu0 0.0
        %367 = vmatpush1.msra.mxu0 0.0
        %368 = vmatprep.subr.mxu0 0.0
        %369 = vmatpush1.msra.mxu0 0.0
        %370 = vmatprep.subr.mxu0 0.0
        %371 = vmatpush1.msra.mxu0 0.0
        %372 = vmatprep.subr.mxu0 0.0
        %373 = vmatpush1.msra.mxu0 0.0
        %374 = vmatprep.subr.mxu0 0.0
        %375 = vmatpush1.msra.mxu0 0.0
        %376 = vmatprep.subr.mxu0 0.0
        %377 = vmatpush1.msra.mxu0 0.0
        %378 = vmatprep.subr.mxu0 0.0
        %379 = vmatpush1.msra.mxu0 0.0
        %380 = vmatprep.subr.mxu0 0.0
        %381 = vmatpush1.msra.mxu0 0.0
        %382 = vmatprep.subr.mxu0 0.0
        %383 = vmatpush1.msra.mxu0 0.0
        %384 = vmatprep.subr.mxu0 0.0
        %385 = vmatpush1.msra.mxu0 0.0
        %386 = vmatprep.subr.mxu0 0.0
        %387 = vmatpush1.msra.mxu0 0.0
        %388 = vmatprep.subr.mxu0 0.0
        %389 = vmatpush1.msra.mxu0 0.0
        %390 = vmatprep.subr.mxu0 0.0
        %391 = vmatpush1.msra.mxu0 0.0
        %392 = vmatprep.subr.mxu0 0.0
        %393 = vmatpush1.msra.mxu0 0.0
        %394 = vmatprep.subr.mxu0 0.0
        %395 = vmatpush1.msra.mxu0 0.0
        %396 = vmatprep.subr.mxu0 0.0
        %397 = vmatpush1.msra.mxu0 0.0
        %398 = vmatprep.mubr.f32.mxu0 0.0
        %399 = vmatmul.mubr.f32.gmra.mrb[0].mxu0 %v329
        %v400 = vpop.f32.mrb[0].mxu0
        %v401 = vadd.f32 %v320, %v400
        %v402 = vpop.f32.mrb[0].mxu0
        %403 = vmatprep.mubr.f32.mxu0 0.0
        %404 = vmatmul.mubr.f32.gmra.mrb[0].mxu0 %v332
        %v405 = vpop.f32.mrb[0].mxu0
        %v406 = vadd.f32 %v325, %v405
        %v407 = vpop.f32.mrb[0].mxu0
        %408 = vdwg.mxu0
        %v409 = vmul.f32 %v401, 0.5
        %v410 = vmul.f32 %v406, 0.5
        %v411 = vmul.f32 %v401, 0.70710677
        %v412 = vmul.f32 %v406, 0.70710677
        %v413 = vand.u32 2147483647, %v411
        %v414 = vand.u32 2147483647, %v412
        %v415 = vmul.f32 %v413, 0.3275911
        %v416 = vmul.f32 %v414, 0.3275911
        %v417 = vadd.f32 %v415, 1.0
        %v418 = vadd.f32 %v416, 1.0
        %v419 = vrcp.pop %v417
        %v420 = vmul.f32 1.0, %v419
        %v421 = vrcp.pop %v418
        %v422 = vmul.f32 1.0, %v421
        %v423 = vmul.f32 %v420, 1.0614054
        %v424 = vmul.f32 %v422, 1.0614054
        %v425 = vadd.f32 %v423, -1.4531521
        %v426 = vadd.f32 %v424, -1.4531521
        %v427 = vmul.f32 %v425, %v420
        %v428 = vmul.f32 %v426, %v422
        %v429 = vadd.f32 %v427, 1.4214138
        %v430 = vadd.f32 %v428, 1.4214138
        %v431 = vmul.f32 %v429, %v420
        %v432 = vmul.f32 %v430, %v422
        %v433 = vadd.f32 %v431, -0.28449672
        %v434 = vadd.f32 %v432, -0.28449672
        %v435 = vmul.f32 %v433, %v420
        %v436 = vmul.f32 %v434, %v422
        %v437 = vadd.f32 %v435, 0.2548296
        %v438 = vadd.f32 %v436, 0.2548296
        %v439 = vmul.f32 %v437, %v420
        %v440 = vmul.f32 %v438, %v422
        %v441 = vsub.f32 0.0, %v413
        %v442 = vsub.f32 0.0, %v414
        %v443 = vmul.f32 %v441, %v413
        %v444 = vmul.f32 %v442, %v414
        %v445 = vmul.f32 %v443, 1.442695
        %v446 = vpow.pop %v445
        %v447 = vmul.f32 %v444, 1.442695
        %v448 = vpow.pop %v447
        %v449 = vmul.f32 %v439, %v446
        %v450 = vmul.f32 %v440, %v448
        %v451 = vsub.f32 1.0, %v449
        %v452 = vsub.f32 1.0, %v450
        %vm453 = vcmp.lt.f32.partialorder %v411, 0.0
        %vm454 = vcmp.lt.f32.partialorder %v412, 0.0
        %v455 = vsub.f32 0.0, %v451
        %v456 = vsub.f32 0.0, %v452
        %v457 = vsel %vm453, %v455, %v451
        %v458 = vsel %vm454, %v456, %v452
        %v459 = vadd.f32 %v457, 1.0
        %v460 = vadd.f32 %v458, 1.0
        %v461 = vmul.f32 %v409, %v459
        %v462 = vmul.f32 %v410, %v460
        %v463 = vld [vmem:[#allocation9] sm:$0xff]
        %vm464 = vcmask 130048
        %v466 = vsel %vm464, %v463, 0
        %468 = vmatprep.subr.mxu0 0.0
        %469 = vmatpush1.msra.mxu0 %v461
        %470 = vmatprep.subr.mxu0 0.0
        %471 = vmatpush1.msra.mxu0 %v462
        %472 = vmatprep.subr.mxu0 0.0
        %473 = vmatpush1.msra.mxu0 0.0
        %474 = vmatprep.subr.mxu0 0.0
        %475 = vmatpush1.msra.mxu0 0.0
        %476 = vmatprep.subr.mxu0 0.0
        %477 = vmatpush1.msra.mxu0 0.0
        %478 = vmatprep.subr.mxu0 0.0
        %479 = vmatpush1.msra.mxu0 0.0
        %480 = vmatprep.subr.mxu0 0.0
        %481 = vmatpush1.msra.mxu0 0.0
        %482 = vmatprep.subr.mxu0 0.0
        %483 = vmatpush1.msra.mxu0 0.0
        %484 = vmatprep.subr.mxu0 0.0
        %485 = vmatpush1.msra.mxu0 0.0
        %486 = vmatprep.subr.mxu0 0.0
        %487 = vmatpush1.msra.mxu0 0.0
        %488 = vmatprep.subr.mxu0 0.0
        %489 = vmatpush1.msra.mxu0 0.0
        %490 = vmatprep.subr.mxu0 0.0
        %491 = vmatpush1.msra.mxu0 0.0
        %492 = vmatprep.subr.mxu0 0.0
        %493 = vmatpush1.msra.mxu0 0.0
        %494 = vmatprep.subr.mxu0 0.0
        %495 = vmatpush1.msra.mxu0 0.0
        %496 = vmatprep.subr.mxu0 0.0
        %497 = vmatpush1.msra.mxu0 0.0
        %498 = vmatprep.subr.mxu0 0.0
        %499 = vmatpush1.msra.mxu0 0.0
        %500 = vmatprep.subr.mxu0 0.0
        %501 = vmatpush1.msra.mxu0 0.0
        %502 = vmatprep.subr.mxu0 0.0
        %503 = vmatpush1.msra.mxu0 0.0
        %504 = vmatprep.subr.mxu0 0.0
        %505 = vmatpush1.msra.mxu0 0.0
        %506 = vmatprep.subr.mxu0 0.0
        %507 = vmatpush1.msra.mxu0 0.0
        %508 = vmatprep.subr.mxu0 0.0
        %509 = vmatpush1.msra.mxu0 0.0
        %510 = vmatprep.subr.mxu0 0.0
        %511 = vmatpush1.msra.mxu0 0.0
        %512 = vmatprep.subr.mxu0 0.0
        %513 = vmatpush1.msra.mxu0 0.0
        %514 = vmatprep.subr.mxu0 0.0
        %515 = vmatpush1.msra.mxu0 0.0
        %516 = vmatprep.subr.mxu0 0.0
        %517 = vmatpush1.msra.mxu0 0.0
        %518 = vmatprep.subr.mxu0 0.0
        %519 = vmatpush1.msra.mxu0 0.0
        %520 = vmatprep.subr.mxu0 0.0
        %521 = vmatpush1.msra.mxu0 0.0
        %522 = vmatprep.subr.mxu0 0.0
        %523 = vmatpush1.msra.mxu0 0.0
        %524 = vmatprep.subr.mxu0 0.0
        %525 = vmatpush1.msra.mxu0 0.0
        %526 = vmatprep.subr.mxu0 0.0
        %527 = vmatpush1.msra.mxu0 0.0
        %528 = vmatprep.subr.mxu0 0.0
        %529 = vmatpush1.msra.mxu0 0.0
        %530 = vmatprep.subr.mxu0 0.0
        %531 = vmatpush1.msra.mxu0 0.0
        %532 = vmatprep.mubr.f32.mxu0 0.0
        %533 = vmatmul.mubr.f32.gmra.mrb[0].mxu0 %v466
        %v534 = vpop.f32.mrb[0].mxu0
        %v535 = vadd.f32 0.0, %v534
        %v536 = vpop.f32.mrb[0].mxu0
        %537 = vdwg.mxu0
        %538 = vst [vmem:[#allocation2] sm:$0xff] %v535
        %v539 = vld [vmem:[#allocation6 + $0x10] sm:$0xff]
        %v540 = vld [vmem:[#allocation6 + $0x18] sm:$0xff]
        %v541 = vld [vmem:[#allocation8 + $0x10] sm:$0xff]
        %v542 = vld [vmem:[#allocation8 + $0x18] sm:$0xff]
        %544 = vset.pattern.permute.xlu0 0
        %545 = vperm.xlu0 %544, %v541
        %v546 = vpop.permute.xlu0 %545
        %549 = vset.pattern.permute.xlu0 0
        %550 = vperm.xlu0 %549, %v542
        %v551 = vpop.permute.xlu0 %550
        %v554 = vsel %vm327, %v539, 0
        %v557 = vsel %vm327, %v540, 0
        %559 = vmatprep.subr.mxu0 0.0
        %560 = vmatpush1.msra.mxu0 %v312
        %561 = vmatprep.subr.mxu0 0.0
        %562 = vmatpush1.msra.mxu0 0.0
        %563 = vmatprep.subr.mxu0 0.0
        %564 = vmatpush1.msra.mxu0 0.0
        %565 = vmatprep.subr.mxu0 0.0
        %566 = vmatpush1.msra.mxu0 0.0
        %567 = vmatprep.subr.mxu0 0.0
        %568 = vmatpush1.msra.mxu0 0.0
        %569 = vmatprep.subr.mxu0 0.0
        %570 = vmatpush1.msra.mxu0 0.0
        %571 = vmatprep.subr.mxu0 0.0
        %572 = vmatpush1.msra.mxu0 0.0
        %573 = vmatprep.subr.mxu0 0.0
        %574 = vmatpush1.msra.mxu0 0.0
        %575 = vmatprep.subr.mxu0 0.0
        %576 = vmatpush1.msra.mxu0 0.0
        %577 = vmatprep.subr.mxu0 0.0
        %578 = vmatpush1.msra.mxu0 0.0
        %579 = vmatprep.subr.mxu0 0.0
        %580 = vmatpush1.msra.mxu0 0.0
        %581 = vmatprep.subr.mxu0 0.0
        %582 = vmatpush1.msra.mxu0 0.0
        %583 = vmatprep.subr.mxu0 0.0
        %584 = vmatpush1.msra.mxu0 0.0
        %585 = vmatprep.subr.mxu0 0.0
        %586 = vmatpush1.msra.mxu0 0.0
        %587 = vmatprep.subr.mxu0 0.0
        %588 = vmatpush1.msra.mxu0 0.0
        %589 = vmatprep.subr.mxu0 0.0
        %590 = vmatpush1.msra.mxu0 0.0
        %591 = vmatprep.subr.mxu0 0.0
        %592 = vmatpush1.msra.mxu0 0.0
        %593 = vmatprep.subr.mxu0 0.0
        %594 = vmatpush1.msra.mxu0 0.0
        %595 = vmatprep.subr.mxu0 0.0
        %596 = vmatpush1.msra.mxu0 0.0
        %597 = vmatprep.subr.mxu0 0.0
        %598 = vmatpush1.msra.mxu0 0.0
        %599 = vmatprep.subr.mxu0 0.0
        %600 = vmatpush1.msra.mxu0 0.0
        %601 = vmatprep.subr.mxu0 0.0
        %602 = vmatpush1.msra.mxu0 0.0
        %603 = vmatprep.subr.mxu0 0.0
        %604 = vmatpush1.msra.mxu0 0.0
        %605 = vmatprep.subr.mxu0 0.0
        %606 = vmatpush1.msra.mxu0 0.0
        %607 = vmatprep.subr.mxu0 0.0
        %608 = vmatpush1.msra.mxu0 0.0
        %609 = vmatprep.subr.mxu0 0.0
        %610 = vmatpush1.msra.mxu0 0.0
        %611 = vmatprep.subr.mxu0 0.0
        %612 = vmatpush1.msra.mxu0 0.0
        %613 = vmatprep.subr.mxu0 0.0
        %614 = vmatpush1.msra.mxu0 0.0
        %615 = vmatprep.subr.mxu0 0.0
        %616 = vmatpush1.msra.mxu0 0.0
        %617 = vmatprep.subr.mxu0 0.0
        %618 = vmatpush1.msra.mxu0 0.0
        %619 = vmatprep.subr.mxu0 0.0
        %620 = vmatpush1.msra.mxu0 0.0
        %621 = vmatprep.subr.mxu0 0.0
        %622 = vmatpush1.msra.mxu0 0.0
        %623 = vmatprep.mubr.f32.mxu0 0.0
        %624 = vmatmul.mubr.f32.gmra.mrb[0].mxu0 %v554
        %v625 = vpop.f32.mrb[0].mxu0
        %v626 = vadd.f32 %v546, %v625
        %v627 = vpop.f32.mrb[0].mxu0
        %628 = vmatprep.mubr.f32.mxu0 0.0
        %629 = vmatmul.mubr.f32.gmra.mrb[0].mxu0 %v557
        %v630 = vpop.f32.mrb[0].mxu0
        %v631 = vadd.f32 %v551, %v630
        %v632 = vpop.f32.mrb[0].mxu0
        %633 = vdwg.mxu0
        %v634 = vmul.f32 %v626, 0.5
        %v635 = vmul.f32 %v631, 0.5
        %v636 = vmul.f32 %v626, 0.70710677
        %v637 = vmul.f32 %v631, 0.70710677
        %v638 = vand.u32 2147483647, %v636
        %v639 = vand.u32 2147483647, %v637
        %v640 = vmul.f32 %v638, 0.3275911
        %v641 = vmul.f32 %v639, 0.3275911
        %v642 = vadd.f32 %v640, 1.0
        %v643 = vadd.f32 %v641, 1.0
        %v644 = vrcp.pop %v642
        %v645 = vmul.f32 1.0, %v644
        %v646 = vrcp.pop %v643
        %v647 = vmul.f32 1.0, %v646
        %v648 = vmul.f32 %v645, 1.0614054
        %v649 = vmul.f32 %v647, 1.0614054
        %v650 = vadd.f32 %v648, -1.4531521
        %v651 = vadd.f32 %v649, -1.4531521
        %v652 = vmul.f32 %v650, %v645
        %v653 = vmul.f32 %v651, %v647
        %v654 = vadd.f32 %v652, 1.4214138
        %v655 = vadd.f32 %v653, 1.4214138
        %v656 = vmul.f32 %v654, %v645
        %v657 = vmul.f32 %v655, %v647
        %v658 = vadd.f32 %v656, -0.28449672
        %v659 = vadd.f32 %v657, -0.28449672
        %v660 = vmul.f32 %v658, %v645
        %v661 = vmul.f32 %v659, %v647
        %v662 = vadd.f32 %v660, 0.2548296
        %v663 = vadd.f32 %v661, 0.2548296
        %v664 = vmul.f32 %v662, %v645
        %v665 = vmul.f32 %v663, %v647
        %v666 = vsub.f32 0.0, %v638
        %v667 = vsub.f32 0.0, %v639
        %v668 = vmul.f32 %v666, %v638
        %v669 = vmul.f32 %v667, %v639
        %v670 = vmul.f32 %v668, 1.442695
        %v671 = vpow.pop %v670
        %v672 = vmul.f32 %v669, 1.442695
        %v673 = vpow.pop %v672
        %v674 = vmul.f32 %v664, %v671
        %v675 = vmul.f32 %v665, %v673
        %v676 = vsub.f32 1.0, %v674
        %v677 = vsub.f32 1.0, %v675
        %vm678 = vcmp.lt.f32.partialorder %v636, 0.0
        %vm679 = vcmp.lt.f32.partialorder %v637, 0.0
        %v680 = vsub.f32 0.0, %v676
        %v681 = vsub.f32 0.0, %v677
        %v682 = vsel %vm678, %v680, %v676
        %v683 = vsel %vm679, %v681, %v677
        %v684 = vadd.f32 %v682, 1.0
        %v685 = vadd.f32 %v683, 1.0
        %v686 = vmul.f32 %v634, %v684
        %v687 = vmul.f32 %v635, %v685
        %v688 = vld [vmem:[#allocation9] sm:$0xff]
        %690 = vrot.lane.b32.xlu0 %v688, 112
        %v691 = vpop.permute.xlu0 %690
        %v692 = vsel %vm464, %v691, 0
        %694 = vmatprep.subr.mxu0 0.0
        %695 = vmatpush1.msra.mxu0 %v686
        %696 = vmatprep.subr.mxu0 0.0
        %697 = vmatpush1.msra.mxu0 %v687
        %698 = vmatprep.subr.mxu0 0.0
        %699 = vmatpush1.msra.mxu0 0.0
        %700 = vmatprep.subr.mxu0 0.0
        %701 = vmatpush1.msra.mxu0 0.0
        %702 = vmatprep.subr.mxu0 0.0
        %703 = vmatpush1.msra.mxu0 0.0
        %704 = vmatprep.subr.mxu0 0.0
        %705 = vmatpush1.msra.mxu0 0.0
        %706 = vmatprep.subr.mxu0 0.0
        %707 = vmatpush1.msra.mxu0 0.0
        %708 = vmatprep.subr.mxu0 0.0
        %709 = vmatpush1.msra.mxu0 0.0
        %710 = vmatprep.subr.mxu0 0.0
        %711 = vmatpush1.msra.mxu0 0.0
        %712 = vmatprep.subr.mxu0 0.0
        %713 = vmatpush1.msra.mxu0 0.0
        %714 = vmatprep.subr.mxu0 0.0
        %715 = vmatpush1.msra.mxu0 0.0
        %716 = vmatprep.subr.mxu0 0.0
        %717 = vmatpush1.msra.mxu0 0.0
        %718 = vmatprep.subr.mxu0 0.0
        %719 = vmatpush1.msra.mxu0 0.0
        %720 = vmatprep.subr.mxu0 0.0
        %721 = vmatpush1.msra.mxu0 0.0
        %722 = vmatprep.subr.mxu0 0.0
        %723 = vmatpush1.msra.mxu0 0.0
        %724 = vmatprep.subr.mxu0 0.0
        %725 = vmatpush1.msra.mxu0 0.0
        %726 = vmatprep.subr.mxu0 0.0
        %727 = vmatpush1.msra.mxu0 0.0
        %728 = vmatprep.subr.mxu0 0.0
        %729 = vmatpush1.msra.mxu0 0.0
        %730 = vmatprep.subr.mxu0 0.0
        %731 = vmatpush1.msra.mxu0 0.0
        %732 = vmatprep.subr.mxu0 0.0
        %733 = vmatpush1.msra.mxu0 0.0
        %734 = vmatprep.subr.mxu0 0.0
        %735 = vmatpush1.msra.mxu0 0.0
        %736 = vmatprep.subr.mxu0 0.0
        %737 = vmatpush1.msra.mxu0 0.0
        %738 = vmatprep.subr.mxu0 0.0
        %739 = vmatpush1.msra.mxu0 0.0
        %740 = vmatprep.subr.mxu0 0.0
        %741 = vmatpush1.msra.mxu0 0.0
        %742 = vmatprep.subr.mxu0 0.0
        %743 = vmatpush1.msra.mxu0 0.0
        %744 = vmatprep.subr.mxu0 0.0
        %745 = vmatpush1.msra.mxu0 0.0
        %746 = vmatprep.subr.mxu0 0.0
        %747 = vmatpush1.msra.mxu0 0.0
        %748 = vmatprep.subr.mxu0 0.0
        %749 = vmatpush1.msra.mxu0 0.0
        %750 = vmatprep.subr.mxu0 0.0
        %751 = vmatpush1.msra.mxu0 0.0
        %752 = vmatprep.subr.mxu0 0.0
        %753 = vmatpush1.msra.mxu0 0.0
        %754 = vmatprep.subr.mxu0 0.0
        %755 = vmatpush1.msra.mxu0 0.0
        %756 = vmatprep.subr.mxu0 0.0
        %757 = vmatpush1.msra.mxu0 0.0
        %758 = vmatprep.mubr.f32.mxu0 0.0
        %759 = vmatmul.mubr.f32.gmra.mrb[0].mxu0 %v692
        %v760 = vpop.f32.mrb[0].mxu0
        %v761 = vadd.f32 0.0, %v760
        %v762 = vpop.f32.mrb[0].mxu0
        %763 = vdwg.mxu0
        %v764 = vld [vmem:[#allocation2] sm:$0xff]
        %v765 = vadd.f32 %v764, %v761
        %766 = vst [vmem:[#allocation2] sm:$0xff] %v765
        %v767 = vld [vmem:[#allocation2] sm:$0xff]
        %v768 = vld [vmem:[#allocation11] sm:$0xff]
        %770 = vset.pattern.permute.xlu0 0
        %771 = vperm.xlu0 %770, %v768
        %v772 = vpop.permute.xlu0 %771
        %v774 = vadd.f32 %v767, %v772
        %775 = vst [vmem:[%s311] sm:$0xff] %v774
        %s776 = sand.u32 %s158, 1
        %s777 = scalar_lea.sflag [#allocation5], %s776
        %s778 = sand.u32 %s158, 1
        %s779 = smul.addr %s778, 8
        %s780 = scalar_lea.vmem [#allocation12], %s779
        // Predicated region
        $region61: #{tpu_custom_call.1} parent=39 // pred_check
          %p781 = pneg %p168
        $region62: #{tpu_custom_call.1} parent=39 // pred_check_branch
          %783 = sbr.rel (%p781) target = $region64
        $region63: #{tpu_custom_call.1} parent=39 // pred_region
          %s785 = ssub.s32 128, 128
          %786 = vsyncadd %s777, %s785
          %s787 = smul.addr %s28, 3
          %s788 = sadd.s32 %s29, %s787
          %s789 = smul.addr %s788, 128
          %s790 = scalar_lea.hbm %s5, %s789
          %s792 = sshll.u32 %s780, 4
          %s793 = int_to_ptr.vmem [resolvable:$true] %s792
          %795 = dma.vmem_to_hbm [thread:$0]  %s793, 128, %s790, %s777
        $region64: #{tpu_custom_call.1} parent=39 // pred_fallthru
          _
      $region40: #{tpu_custom_call.1} parent=5 // pred_fallthru
        _
      %p796 = scmp.le.s32.totalorder 2, %s19
      // Predicated region
      $region65: #{tpu_custom_call.1} parent=5 // pred_check
        %p797 = pneg %p796
      $region66: #{tpu_custom_call.1} parent=5 // pred_check_branch
        %799 = sbr.rel (%p797) target = $region68
      $region67: #{tpu_custom_call.1} parent=5 // pred_region
        %s800 = ssub.s32 %s19, 2
        // Predicated region
        $region69: #{tpu_custom_call.1} parent=67 // pred_check
          %p801 = pneg %p174
        $region70: #{tpu_custom_call.1} parent=67 // pred_check_branch
          %803 = sbr.rel (%p801) target = $region72
        $region71: #{tpu_custom_call.1} parent=67 // pred_region
          %s804 = sand.u32 %s159, 1
          %s805 = scalar_lea.sflag [#allocation5], %s804
          %s806 = sand.u32 %s159, 1
          %s807 = smul.addr %s806, 8
          %s808 = scalar_lea.vmem [#allocation12], %s807
          %809 = dma.done %s805, 128
        $region72: #{tpu_custom_call.1} parent=67 // pred_fallthru
          _
      $region68: #{tpu_custom_call.1} parent=5 // pred_fallthru
        _
    $region6: #{tpu_custom_call.1} parent=1 // loop_footer
      %s23 = sadd.s32 1, %s19
    $region7: #{tpu_custom_call.1} parent=1 // loop_footer_branch
      %18 = sbr.rel target = $region3
    $region8: #{tpu_custom_call.1} parent=1 // loop_exit
      _
    %810 = vsyncpa [#allocation4], 1
    %s811 = scalar_lea.sflag [#allocation4], 1
    %812 = vsyncpa %s811, 1
    %813 = vsyncpa [#allocation7], 1
    %814 = vsyncpa [#allocation10], 1
    %815 = vsyncpa [#allocation5], 1
    %s816 = scalar_lea.sflag [#allocation5], 1
    %817 = vsyncpa %s816, 1

</llo_original>
